<compile_context>
chip_gen: v7x
topology: tpu7x:2x2x1
jax: 0.10.0
libtpu: 0.0.40
codegen_flags: <defaults>
</compile_context>

<pallas_src>
import functools

import jax
import jax.numpy as jnp
from jax.experimental import pallas as pl
from jax.experimental.pallas import tpu as pltpu


# ---------------------------------------------------------------------------
# Fused kernel: both SAGEConv layers in one pallas_call (small graphs).
# ---------------------------------------------------------------------------
def _sage_fused_kernel(adj_ref, x_ref, w1_ref, b1_ref, w2_ref, b2_ref, out_ref,
                       *, num_classes):
    """adj, x and stacked weights [W_l; W_r] are fully VMEM-resident."""
    adj = adj_ref[...]
    x = x_ref[...]

    agg1 = jnp.dot(adj, x, preferred_element_type=jnp.float32).astype(jnp.bfloat16)
    z1 = jnp.dot(jnp.concatenate([agg1, x], axis=1), w1_ref[...],
                 preferred_element_type=jnp.float32) + b1_ref[...]
    h = jnp.maximum(z1, 0.0).astype(jnp.bfloat16)     # dropout == identity (eval)

    agg2 = jnp.dot(adj, h, preferred_element_type=jnp.float32).astype(jnp.bfloat16)
    z2 = jnp.dot(jnp.concatenate([agg2, h], axis=1), w2_ref[...],
                 preferred_element_type=jnp.float32) + b2_ref[...]

    # Mask padded class lanes, then numerically-stable log_softmax (f32).
    lane = jax.lax.broadcasted_iota(jnp.int32, z2.shape, 1)
    z2 = jnp.where(lane < num_classes, z2, jnp.float32(-1e30))
    z2 = z2 - jnp.max(z2, axis=1, keepdims=True)
    out_ref[...] = (z2 - jnp.log(jnp.sum(jnp.exp(z2), axis=1, keepdims=True))
                    ).astype(out_ref.dtype)


def sage_fused(adj, x, w1, b1, w2, b2, *, num_classes):
    n = adj.shape[0]
    c_pad = w2.shape[1]
    return pl.pallas_call(
        functools.partial(_sage_fused_kernel, num_classes=num_classes),
        out_shape=jax.ShapeDtypeStruct((n, c_pad), jnp.float32),
        in_specs=[pl.BlockSpec(adj.shape, lambda: (0, 0)),
                  pl.BlockSpec(x.shape, lambda: (0, 0)),
                  pl.BlockSpec(w1.shape, lambda: (0, 0)),
                  pl.BlockSpec(b1.shape, lambda: (0, 0)),
                  pl.BlockSpec(w2.shape, lambda: (0, 0)),
                  pl.BlockSpec(b2.shape, lambda: (0, 0))],
        out_specs=pl.BlockSpec((n, c_pad), lambda: (0, 0)),
        compiler_params=pltpu.CompilerParams(vmem_limit_bytes=32 << 20),
    )(adj, x, w1, b1, w2, b2)


# ---------------------------------------------------------------------------
# Tiled kernel: one SAGEConv layer, grid over adjacency (row_tile, k_tile).
# ---------------------------------------------------------------------------
def _sage_layer_kernel(adj_ref, x_ref, w_ref, b_ref, out_ref, acc_ref, *,
                       apply_relu, log_softmax_valid):
    """x_ref holds the full bf16 feature matrix resident in VMEM; the kernel
    slices the neighbour block (k) for aggregation and the self block (i) for
    the root term. acc_ref accumulates A_mean[rows, :] @ x in f32."""
    i = pl.program_id(0)
    k = pl.program_id(1)
    tm, d_in = acc_ref.shape
    tk = adj_ref.shape[1]

    x_k = x_ref[pl.ds(pl.multiple_of(k * tk, tk), tk), :]         # (tk, d_in)
    prod = jnp.dot(adj_ref[...], x_k, preferred_element_type=jnp.float32)

    @pl.when(k == 0)                   # skip zero-fill: write directly on k==0
    def _():
        acc_ref[...] = prod

    @pl.when(k > 0)
    def _():
        acc_ref[...] += prod

    @pl.when(k == pl.num_programs(1) - 1)
    def _():
        agg = acc_ref[...].astype(jnp.bfloat16)                    # (tm, d_in)
        x_i = x_ref[pl.ds(pl.multiple_of(i * tm, tm), tm), :]      # (tm, d_in)
        # Fused epilogue: [agg | x_self] @ [W_l; W_r] -> K = 2*d_in fills the
        # 256-deep MXU on v6e/v7x; one matmul instead of two plus an add.
        z = jnp.dot(jnp.concatenate([agg, x_i], axis=1), w_ref[...],
                    preferred_element_type=jnp.float32) + b_ref[...]
        if apply_relu:
            z = jnp.maximum(z, 0.0)
        if log_softmax_valid is not None:
            lane = jax.lax.broadcasted_iota(jnp.int32, z.shape, 1)
            z = jnp.where(lane < log_softmax_valid, z, jnp.float32(-1e30))
            z = z - jnp.max(z, axis=1, keepdims=True)
            z = z - jnp.log(jnp.sum(jnp.exp(z), axis=1, keepdims=True))
        out_ref[...] = z.astype(out_ref.dtype)


def _pick_tiles(n):
    """Adjacency tile sizes: big k tiles for DMA/roofline efficiency; row tiles
    capped so the 'parallel' row axis keeps >= 2 tiles (v7x has 2 TCs)."""
    tk = 128
    while tk < min(1024, n) and n % (tk * 2) == 0:
        tk *= 2
    tm = 128
    while tm < min(512, n) and n % (tm * 2) == 0 and n // (tm * 2) >= 2:
        tm *= 2
    return tm, tk


def sage_layer(adj, x, w_stacked, b, *, apply_relu, log_softmax_valid=None,
               out_dtype=jnp.float32):
    n = adj.shape[0]
    d_in = x.shape[1]
    d_out = w_stacked.shape[1]
    assert adj.shape == (n, n) and w_stacked.shape[0] == 2 * d_in
    assert n % 128 == 0 and d_in % 128 == 0 and d_out % 128 == 0
    # TODO(synk): resident-x path only; a CSR / streamed scheme is needed once
    # the node-feature matrix no longer fits in VMEM.
    assert n * d_in * 2 <= (8 << 20), "resident-x path needs x to fit in VMEM"

    tm, tk = _pick_tiles(n)
    grid = (n // tm, n // tk)

    # adj is the only operand that changes every (i, k) step; deepen its
    # pipeline when the grid is big enough for a third buffer to matter.
    if grid[0] * grid[1] >= 3:
        adj_spec = pl.BlockSpec((tm, tk), lambda i, k: (i, k),
                                pipeline_mode=pl.Buffered(3))
    else:
        adj_spec = pl.BlockSpec((tm, tk), lambda i, k: (i, k))

    kernel = functools.partial(_sage_layer_kernel, apply_relu=apply_relu,
                               log_softmax_valid=log_softmax_valid)

    out_bytes = jnp.dtype(out_dtype).itemsize
    flops = 2 * n * n * d_in + 2 * n * (2 * d_in) * d_out
    bytes_accessed = (n * n * 2                 # adjacency streamed once
                      + n * d_in * 2            # x read once (VMEM resident)
                      + 2 * d_in * d_out * 2 + d_out * 4
                      + n * d_out * out_bytes)
    transcendentals = n * d_out if log_softmax_valid is not None else 0

    return pl.pallas_call(
        kernel,
        out_shape=jax.ShapeDtypeStruct((n, d_out), out_dtype),
        grid_spec=pltpu.PrefetchScalarGridSpec(
            num_scalar_prefetch=0,
            grid=grid,
            in_specs=[
                adj_spec,                                              # adj tile
                pl.BlockSpec((n, d_in), lambda i, k: (0, 0)),          # x (resident)
                pl.BlockSpec((2 * d_in, d_out), lambda i, k: (0, 0)),  # [W_l; W_r]
                pl.BlockSpec((1, d_out), lambda i, k: (0, 0)),         # bias (f32)
            ],
            out_specs=pl.BlockSpec((tm, d_out), lambda i, k: (i, 0)),
            scratch_shapes=[pltpu.VMEM((tm, d_in), jnp.float32)],      # f32 accum
        ),
        compiler_params=pltpu.CompilerParams(
            # Row tiles are independent -> "parallel" (shards across the two
            # v7x TensorCores); k is the reduction axis -> "arbitrary".
            dimension_semantics=("parallel", "arbitrary"),
            # 32 MiB is safe on every generation (v7x has only 64 MiB physical).
            vmem_limit_bytes=32 << 20,
        ),
        cost_estimate=pl.CostEstimate(flops=flops,
                                      transcendentals=transcendentals,
                                      bytes_accessed=bytes_accessed),
    )(adj, x, w_stacked, b)


def sage_forward(adj, x, w1, b1, w2, b2, *, num_classes, force_tiled=False):
    """Two SAGEConv layers + relu + (identity) dropout + masked log_softmax."""
    n, d_in = x.shape
    h_dim = w1.shape[1]
    c_pad = w2.shape[1]
    resident_bytes = (n * n * 2 + n * d_in * 2 + n * h_dim * 2
                      + w1.size * 2 + w2.size * 2 + 2 * n * c_pad * 4)
    if not force_tiled and resident_bytes <= (10 << 20):
        # Small graph: single fused call (no HBM round trip for h, no second
        # launch, no adjacency re-read).
        return sage_fused(adj, x, w1, b1, w2, b2, num_classes=num_classes)

    h = sage_layer(adj, x, w1, b1, apply_relu=True, out_dtype=jnp.bfloat16)
    # dropout(p, training) -> identity (eval mode)
    return sage_layer(adj, h, w2, b2, apply_relu=False,
                      log_softmax_valid=num_classes, out_dtype=jnp.float32)


# ---------------------------------------------------------------------------
# Graph / parameter construction (plain JAX glue).
# ---------------------------------------------------------------------------
def build_mean_adjacency(edge_index, num_nodes):
    """Dense row-normalized adjacency D_in^-1 A for mean aggregation.

    Matches PyG message passing (source_to_target): A[i, j] = #edges j -> i,
    duplicate edges counted (scatter-add); rows with no in-edges stay zero.
    """
    src, dst = edge_index
    a = jnp.zeros((num_nodes, num_nodes), jnp.float32)
    a = a.at[dst, src].add(1.0)
    deg = jnp.sum(a, axis=1, keepdims=True)
    return a / jnp.where(deg > 0, deg, 1.0)


def glorot(key, shape):
    fan_in, fan_out = shape
    limit = jnp.sqrt(6.0 / (fan_in + fan_out))
    return jax.random.uniform(key, shape, jnp.float32, -limit, limit)


def round_up(v, m):
    return (v + m - 1) // m * m


def pad_to(a, shape):
    return jnp.pad(a, [(0, s - d) for d, s in zip(a.shape, shape)])


if __name__ == "__main__":
    # Small synthetic "dataset": N nodes, num_features, hidden, num_classes.
    N, NUM_FEATURES, HIDDEN, NUM_CLASSES = 32, 16, 32, 8

    key = jax.random.PRNGKey(0)
    kx, ke, k1, k2, k3, k4, k5, k6 = jax.random.split(key, 8)

    # Node features.
    x = jax.random.normal(kx, (N, NUM_FEATURES), jnp.float32)

    # Deterministic symmetric edge_index: a ring plus a few chords.
    ring_src = jnp.arange(N, dtype=jnp.int32)
    ring_dst = (ring_src + 1) % N
    chord_src = jax.random.randint(ke, (16,), 0, N, dtype=jnp.int32)
    chord_dst = (chord_src + 5) % N
    src = jnp.concatenate([ring_src, chord_src, ring_dst, chord_dst])
    dst = jnp.concatenate([ring_dst, chord_dst, ring_src, chord_src])
    edge_index = jnp.stack([src, dst], axis=0)

    adj = build_mean_adjacency(edge_index, N)

    # SAGEConv params: lin_l (aggregated neighbours, with bias), lin_r (self).
    wl1 = glorot(k1, (NUM_FEATURES, HIDDEN))
    wr1 = glorot(k2, (NUM_FEATURES, HIDDEN))
    b1 = 0.1 * jax.random.normal(k5, (1, HIDDEN), jnp.float32)
    wl2 = glorot(k3, (HIDDEN, NUM_CLASSES))
    wr2 = glorot(k4, (HIDDEN, NUM_CLASSES))
    b2 = 0.1 * jax.random.normal(k6, (1, NUM_CLASSES), jnp.float32)

    # --- pad to hardware tiles, stack [W_l; W_r], cast MXU operands to bf16 --
    N_pad = round_up(N, 128)
    F_pad = round_up(NUM_FEATURES, 128)
    H_pad = round_up(HIDDEN, 128)
    C_pad = round_up(NUM_CLASSES, 128)

    adj_p = pad_to(adj, (N_pad, N_pad)).astype(jnp.bfloat16)
    x_p = pad_to(x, (N_pad, F_pad)).astype(jnp.bfloat16)
    w1_p = jnp.concatenate([pad_to(wl1, (F_pad, H_pad)),
                            pad_to(wr1, (F_pad, H_pad))],
                           axis=0).astype(jnp.bfloat16)
    w2_p = jnp.concatenate([pad_to(wl2, (H_pad, C_pad)),
                            pad_to(wr2, (H_pad, C_pad))],
                           axis=0).astype(jnp.bfloat16)
    b1_p = pad_to(b1, (1, H_pad))                      # biases stay f32
    b2_p = pad_to(b2, (1, C_pad))

    # Fused single-call path (what small graphs use) ...
    out_fused = jax.block_until_ready(
        sage_forward(adj_p, x_p, w1_p, b1_p, w2_p, b2_p,
                     num_classes=NUM_CLASSES))[:N, :NUM_CLASSES]
    # ... and the tiled per-layer path (what large graphs use), forced here so
    # both kernels are exercised and validated.
    out_tiled = jax.block_until_ready(
        sage_forward(adj_p, x_p, w1_p, b1_p, w2_p, b2_p,
                     num_classes=NUM_CLASSES, force_tiled=True))[:N, :NUM_CLASSES]

    # --- pure-JAX reference (same bf16 casts, f32 math) ----------------------
    adj_f = adj_p.astype(jnp.float32)
    x_f = x_p.astype(jnp.float32)
    w1_f = w1_p.astype(jnp.float32)
    w2_f = w2_p.astype(jnp.float32)

    agg1 = (adj_f @ x_f).astype(jnp.bfloat16).astype(jnp.float32)
    h_ref = jnp.maximum(jnp.concatenate([agg1, x_f], axis=1) @ w1_f + b1_p, 0.0)
    h_ref = h_ref.astype(jnp.bfloat16).astype(jnp.float32)
    agg2 = (adj_f @ h_ref).astype(jnp.bfloat16).astype(jnp.float32)
    logits_ref = jnp.concatenate([agg2, h_ref], axis=1) @ w2_f + b2_p
    ref = jax.nn.log_softmax(logits_ref[:N, :NUM_CLASSES], axis=1)

    for out in (out_fused, out_tiled):
        assert out.shape == (N, NUM_CLASSES)
        assert jnp.all(jnp.isfinite(out))
        assert jnp.allclose(out, ref, atol=2e-2, rtol=2e-2)

    print("KERNEL_OK")
</pallas_src>

<mosaic_0001>
module attributes {stable_mosaic.version = 11 : i64} {
  func.func @_sage_fused_kernel(%arg0: memref<128x128xbf16, #tpu.memory_space<vmem>>, %arg1: memref<128x128xbf16, #tpu.memory_space<vmem>>, %arg2: memref<256x128xbf16, #tpu.memory_space<vmem>>, %arg3: memref<1x128xf32, #tpu.memory_space<vmem>>, %arg4: memref<256x128xbf16, #tpu.memory_space<vmem>>, %arg5: memref<1x128xf32, #tpu.memory_space<vmem>>, %arg6: memref<128x128xf32, #tpu.memory_space<vmem>>) attributes {dimension_semantics = [], scalar_prefetch = 0 : i64, scratch_operands = 0 : i64, tpu.core_type = #tpu.core_type<tc>} {
    %c0 = arith.constant 0 : index
    %c0_0 = arith.constant 0 : index
    %0 = vector.load %arg0[%c0, %c0_0] : memref<128x128xbf16, #tpu.memory_space<vmem>>, vector<128x128xbf16>
    %c0_1 = arith.constant 0 : index
    %c0_2 = arith.constant 0 : index
    %1 = vector.load %arg1[%c0_1, %c0_2] : memref<128x128xbf16, #tpu.memory_space<vmem>>, vector<128x128xbf16>
    %cst = arith.constant dense<0.000000e+00> : vector<128x128xf32>
    %2 = tpu.matmul %0, %1, %cst {dimension_numbers = #tpu.dot_dimension_numbers<[1], [0], [0], [1], [0, 0, 1, 1], [], []>} : vector<128x128xbf16>, vector<128x128xbf16>, vector<128x128xf32> -> vector<128x128xf32>
    %3 = arith.truncf %2 : vector<128x128xf32> to vector<128x128xbf16>
    %4 = tpu.concatenate %3, %1 in 1 : vector<128x128xbf16>, vector<128x128xbf16> -> vector<128x256xbf16>
    %c0_3 = arith.constant 0 : index
    %c0_4 = arith.constant 0 : index
    %5 = vector.load %arg2[%c0_3, %c0_4] : memref<256x128xbf16, #tpu.memory_space<vmem>>, vector<256x128xbf16>
    %cst_5 = arith.constant dense<0.000000e+00> : vector<128x128xf32>
    %6 = tpu.matmul %4, %5, %cst_5 {dimension_numbers = #tpu.dot_dimension_numbers<[1], [0], [0], [1], [0, 0, 1, 1], [], []>} : vector<128x256xbf16>, vector<256x128xbf16>, vector<128x128xf32> -> vector<128x128xf32>
    %c0_6 = arith.constant 0 : index
    %c0_7 = arith.constant 0 : index
    %7 = vector.load %arg3[%c0_6, %c0_7] : memref<1x128xf32, #tpu.memory_space<vmem>>, vector<1x128xf32>
    %8 = vector.broadcast %7 : vector<1x128xf32> to vector<128x128xf32>
    %9 = arith.addf %6, %8 : vector<128x128xf32>
    %cst_8 = arith.constant 0.000000e+00 : f32
    %10 = vector.broadcast %cst_8 : f32 to vector<128x128xf32>
    %11 = arith.maximumf %9, %10 : vector<128x128xf32>
    %12 = arith.truncf %11 : vector<128x128xf32> to vector<128x128xbf16>
    %cst_9 = arith.constant dense<0.000000e+00> : vector<128x128xf32>
    %13 = tpu.matmul %0, %12, %cst_9 {dimension_numbers = #tpu.dot_dimension_numbers<[1], [0], [0], [1], [0, 0, 1, 1], [], []>} : vector<128x128xbf16>, vector<128x128xbf16>, vector<128x128xf32> -> vector<128x128xf32>
    %14 = arith.truncf %13 : vector<128x128xf32> to vector<128x128xbf16>
    %15 = tpu.concatenate %14, %12 in 1 : vector<128x128xbf16>, vector<128x128xbf16> -> vector<128x256xbf16>
    %c0_10 = arith.constant 0 : index
    %c0_11 = arith.constant 0 : index
    %16 = vector.load %arg4[%c0_10, %c0_11] : memref<256x128xbf16, #tpu.memory_space<vmem>>, vector<256x128xbf16>
    %cst_12 = arith.constant dense<0.000000e+00> : vector<128x128xf32>
    %17 = tpu.matmul %15, %16, %cst_12 {dimension_numbers = #tpu.dot_dimension_numbers<[1], [0], [0], [1], [0, 0, 1, 1], [], []>} : vector<128x256xbf16>, vector<256x128xbf16>, vector<128x128xf32> -> vector<128x128xf32>
    %c0_13 = arith.constant 0 : index
    %c0_14 = arith.constant 0 : index
    %18 = vector.load %arg5[%c0_13, %c0_14] : memref<1x128xf32, #tpu.memory_space<vmem>>, vector<1x128xf32>
    %19 = vector.broadcast %18 : vector<1x128xf32> to vector<128x128xf32>
    %20 = arith.addf %17, %19 : vector<128x128xf32>
    %21 = tpu.iota {dimensions = array<i32: 1>} : vector<128x128xi32>
    %c8_i32 = arith.constant 8 : i32
    %22 = vector.broadcast %c8_i32 : i32 to vector<128x128xi32>
    %23 = arith.cmpi slt, %21, %22 : vector<128x128xi32>
    %cst_15 = arith.constant -1.000000e+30 : f32
    %24 = vector.broadcast %cst_15 : f32 to vector<128x128xf32>
    %25 = arith.select %23, %20, %24 : vector<128x128xi1>, vector<128x128xf32>
    %cst_16 = arith.constant dense<0xFF800000> : vector<128xf32>
    %26 = vector.multi_reduction <maximumf>, %25, %cst_16 [1] : vector<128x128xf32> to vector<128xf32>
    %27 = vector.shape_cast %26 : vector<128xf32> to vector<128x1xf32>
    %28 = vector.broadcast %27 : vector<128x1xf32> to vector<128x128xf32>
    %29 = arith.subf %25, %28 : vector<128x128xf32>
    %30 = math.exp %29 : vector<128x128xf32>
    %cst_17 = arith.constant dense<0.000000e+00> : vector<128xf32>
    %31 = vector.multi_reduction <add>, %30, %cst_17 [1] : vector<128x128xf32> to vector<128xf32>
    %32 = vector.shape_cast %31 : vector<128xf32> to vector<128x1xf32>
    %33 = math.log %32 : vector<128x1xf32>
    %34 = vector.broadcast %33 : vector<128x1xf32> to vector<128x128xf32>
    %35 = arith.subf %29, %34 : vector<128x128xf32>
    %c0_18 = arith.constant 0 : index
    %c0_19 = arith.constant 0 : index
    %36 = vector.load %arg6[%c0_18, %c0_19] : memref<128x128xf32, #tpu.memory_space<vmem>>, vector<128x128xf32>
    tpu.vector_store %arg6[%c0_18, %c0_19], %35 {strides = array<i32>} : memref<128x128xf32, #tpu.memory_space<vmem>>, vector<128x128xf32>,
    return
  }
}

</mosaic_0001>

<llo_original>
// kernel: tpu_custom_call.1
$region0: #{tpu_custom_call.1}
  #allocation0 [shape = 'u32[]', space=smem, size = 0x4, offset = 0x4, fixed_abs, tag = 'smem constant byte address 0x4 - core index']
  #allocation1 [shape = 'u32[144,128]{1,0:T(1,128)}', space=vmem, size = 0x12000, scoped, tag = 'internal scratch']
  %s0 = inlined_call_operand.hbm [shape: bf16[128,128], index: 0, kind: input, shape index: {}]
  %s1 = inlined_call_operand.hbm [shape: bf16[128,128], index: 1, kind: input, shape index: {}]
  %s2 = inlined_call_operand.hbm [shape: bf16[256,128], index: 2, kind: input, shape index: {}]
  %s3 = inlined_call_operand.vmem [shape: f32[1,128], index: 3, kind: input, shape index: {}]
  %s4 = inlined_call_operand.hbm [shape: bf16[256,128], index: 4, kind: input, shape index: {}]
  %s5 = inlined_call_operand.vmem [shape: f32[1,128], index: 5, kind: input, shape index: {}]
  %s6 = inlined_call_operand.hbm [shape: f32[128,128], index: 6, kind: output, shape index: {}]
  %s7 = sld [smem:[#allocation0]]
  $region50: #{tpu_custom_call.1} parent=0
    _
  %s9 = ssub.s32 1, %s7
  %s10 = scalar_select 0, %s9, %s7
  $region1: #{tpu_custom_call.1} parent=0
    #allocation2 [shape = 'u8[32768]{0}', space=vmem, size = 0x8000, scoped, tag = 'input window, operand 0, single buffered']
    #allocation3 [shape = 's32[1]{0}', space=sflag, size = 0x4, scoped, tag = 'scoped memory for tpu_custom_call.1']
    #allocation4 [shape = 's32[1]{0}', space=sflag, size = 0x4, scoped, tag = 'scoped memory for tpu_custom_call.1']
    #allocation5 [shape = 'u8[32768]{0}', space=vmem, size = 0x8000, scoped, tag = 'input window, operand 1, single buffered']
    #allocation6 [shape = 's32[1]{0}', space=sflag, size = 0x4, scoped, tag = 'scoped memory for tpu_custom_call.1']
    #allocation7 [shape = 'u8[65536]{0}', space=vmem, size = 0x10000, scoped, tag = 'input window, operand 2, single buffered']
    #allocation8 [shape = 'u8[65536]{0}', space=vmem, size = 0x10000, scoped, tag = 'input window, operand 4, single buffered']
    #allocation9 [shape = 's32[1]{0}', space=sflag, size = 0x4, scoped, tag = 'scoped memory for tpu_custom_call.1']
    #allocation10 [shape = 'u8[65536]{0}', space=vmem, size = 0x10000, scoped, tag = 'output window, operand 0, single buffered']
    %11 = vsyncpa [#allocation3], 0
    %12 = vsyncpa [#allocation6], 0
    %13 = vsyncpa [#allocation9], 0
    %14 = vsyncpa [#allocation4], 0
    // Predicated region
    $region2: #{tpu_custom_call.1} parent=1 // pred_check
      _
    $region3: #{tpu_custom_call.1} parent=1 // pred_check_branch
      %16 = sbr.rel (0) target = $region5
    $region4: #{tpu_custom_call.1} parent=1 // pred_region
      %s18 = ssub.s32 1024, 1024
      %19 = vsyncadd [#allocation3], %s18
      %s20 = sshll.u32 [#allocation2], 4
      %s21 = int_to_ptr.vmem [resolvable:$true] %s20
      %26 = dma.hbm_to_vmem [thread:$0]  %s0, 1024, %s21, [#allocation3], 64, 64, 4
    $region5: #{tpu_custom_call.1} parent=1 // pred_fallthru
      _
    // Predicated region
    $region6: #{tpu_custom_call.1} parent=1 // pred_check
      _
    $region7: #{tpu_custom_call.1} parent=1 // pred_check_branch
      %28 = sbr.rel (0) target = $region9
    $region8: #{tpu_custom_call.1} parent=1 // pred_region
      %s30 = ssub.s32 1024, 1024
      %31 = vsyncadd [#allocation6], %s30
      %s32 = sshll.u32 [#allocation5], 4
      %s33 = int_to_ptr.vmem [resolvable:$true] %s32
      %38 = dma.hbm_to_vmem [thread:$0]  %s1, 1024, %s33, [#allocation6], 64, 64, 4
    $region9: #{tpu_custom_call.1} parent=1 // pred_fallthru
      _
    // Predicated region
    $region10: #{tpu_custom_call.1} parent=1 // pred_check
      _
    $region11: #{tpu_custom_call.1} parent=1 // pred_check_branch
      %40 = sbr.rel (0) target = $region13
    $region12: #{tpu_custom_call.1} parent=1 // pred_region
      %s42 = ssub.s32 2048, 2048
      %43 = vsyncadd [#allocation6], %s42
      %s44 = sshll.u32 [#allocation7], 4
      %s45 = int_to_ptr.vmem [resolvable:$true] %s44
      %50 = dma.hbm_to_vmem [thread:$0]  %s2, 2048, %s45, [#allocation6], 64, 64, 4
    $region13: #{tpu_custom_call.1} parent=1 // pred_fallthru
      _
    // Predicated region
    $region14: #{tpu_custom_call.1} parent=1 // pred_check
      _
    $region15: #{tpu_custom_call.1} parent=1 // pred_check_branch
      %52 = sbr.rel (0) target = $region17
    $region16: #{tpu_custom_call.1} parent=1 // pred_region
      _
    $region17: #{tpu_custom_call.1} parent=1 // pred_fallthru
      _
    // Predicated region
    $region18: #{tpu_custom_call.1} parent=1 // pred_check
      _
    $region19: #{tpu_custom_call.1} parent=1 // pred_check_branch
      %54 = sbr.rel (0) target = $region21
    $region20: #{tpu_custom_call.1} parent=1 // pred_region
      %s56 = ssub.s32 2048, 2048
      %57 = vsyncadd [#allocation9], %s56
      %s58 = sshll.u32 [#allocation8], 4
      %s59 = int_to_ptr.vmem [resolvable:$true] %s58
      %64 = dma.hbm_to_vmem [thread:$0]  %s4, 2048, %s59, [#allocation9], 64, 64, 4
    $region21: #{tpu_custom_call.1} parent=1 // pred_fallthru
      _
    // Predicated region
    $region22: #{tpu_custom_call.1} parent=1 // pred_check
      _
    $region23: #{tpu_custom_call.1} parent=1 // pred_check_branch
      %66 = sbr.rel (0) target = $region25
    $region24: #{tpu_custom_call.1} parent=1 // pred_region
      _
    $region25: #{tpu_custom_call.1} parent=1 // pred_fallthru
      _
    // Predicated region
    $region26: #{tpu_custom_call.1} parent=1 // pred_check
      _
    $region27: #{tpu_custom_call.1} parent=1 // pred_check_branch
      %68 = sbr.rel (0) target = $region29
    $region28: #{tpu_custom_call.1} parent=1 // pred_region
      %69 = dma.done [#allocation3], 1024
    $region29: #{tpu_custom_call.1} parent=1 // pred_fallthru
      _
    // Predicated region
    $region30: #{tpu_custom_call.1} parent=1 // pred_check
      _
    $region31: #{tpu_custom_call.1} parent=1 // pred_check_branch
      %71 = sbr.rel (0) target = $region33
    $region32: #{tpu_custom_call.1} parent=1 // pred_region
      %72 = dma.done [#allocation6], 1024
    $region33: #{tpu_custom_call.1} parent=1 // pred_fallthru
      _
    // Predicated region
    $region34: #{tpu_custom_call.1} parent=1 // pred_check
      _
    $region35: #{tpu_custom_call.1} parent=1 // pred_check_branch
      %74 = sbr.rel (0) target = $region37
    $region36: #{tpu_custom_call.1} parent=1 // pred_region
      %75 = dma.done [#allocation6], 2048
    $region37: #{tpu_custom_call.1} parent=1 // pred_fallthru
      _
    // Predicated region
    $region38: #{tpu_custom_call.1} parent=1 // pred_check
      _
    $region39: #{tpu_custom_call.1} parent=1 // pred_check_branch
      %77 = sbr.rel (0) target = $region41
    $region40: #{tpu_custom_call.1} parent=1 // pred_region
      %78 = dma.done [#allocation9], 2048
    $region41: #{tpu_custom_call.1} parent=1 // pred_fallthru
      _
    %v80 = vld [vmem:[#allocation2] sm:$0xf]
    %v81 = vld [vmem:[#allocation2 + $0x4] sm:$0xf]
    %v82 = vld [vmem:[#allocation2 + $0x8] sm:$0xf]
    %v83 = vld [vmem:[#allocation2 + $0xc] sm:$0xf]
    %v84 = vld [vmem:[#allocation2 + $0x10] sm:$0xf]
    %v85 = vld [vmem:[#allocation2 + $0x14] sm:$0xf]
    %v86 = vld [vmem:[#allocation2 + $0x18] sm:$0xf]
    %v87 = vld [vmem:[#allocation2 + $0x1c] sm:$0xf]
    %v88 = vld [vmem:[#allocation2 + $0x20] sm:$0xf]
    %v89 = vld [vmem:[#allocation2 + $0x24] sm:$0xf]
    %v90 = vld [vmem:[#allocation2 + $0x28] sm:$0xf]
    %v91 = vld [vmem:[#allocation2 + $0x2c] sm:$0xf]
    %v92 = vld [vmem:[#allocation2 + $0x30] sm:$0xf]
    %v93 = vld [vmem:[#allocation2 + $0x34] sm:$0xf]
    %v94 = vld [vmem:[#allocation2 + $0x38] sm:$0xf]
    %v95 = vld [vmem:[#allocation2 + $0x3c] sm:$0xf]
    %v96 = vld [vmem:[#allocation5] sm:$0xf]
    %v97 = vld [vmem:[#allocation5 + $0x4] sm:$0xf]
    %v98 = vld [vmem:[#allocation5 + $0x8] sm:$0xf]
    %v99 = vld [vmem:[#allocation5 + $0xc] sm:$0xf]
    %v100 = vld [vmem:[#allocation5 + $0x10] sm:$0xf]
    %v101 = vld [vmem:[#allocation5 + $0x14] sm:$0xf]
    %v102 = vld [vmem:[#allocation5 + $0x18] sm:$0xf]
    %v103 = vld [vmem:[#allocation5 + $0x1c] sm:$0xf]
    %v104 = vld [vmem:[#allocation5 + $0x20] sm:$0xf]
    %v105 = vld [vmem:[#allocation5 + $0x24] sm:$0xf]
    %v106 = vld [vmem:[#allocation5 + $0x28] sm:$0xf]
    %v107 = vld [vmem:[#allocation5 + $0x2c] sm:$0xf]
    %v108 = vld [vmem:[#allocation5 + $0x30] sm:$0xf]
    %v109 = vld [vmem:[#allocation5 + $0x34] sm:$0xf]
    %v110 = vld [vmem:[#allocation5 + $0x38] sm:$0xf]
    %v111 = vld [vmem:[#allocation5 + $0x3c] sm:$0xf]
    %v128 = vunpack.c.l.b16 %v80
    %v129 = vunpack.c.l.b16 %v81
    %v130 = vunpack.c.l.b16 %v82
    %v131 = vunpack.c.l.b16 %v83
    %v132 = vunpack.c.l.b16 %v84
    %v133 = vunpack.c.l.b16 %v85
    %v134 = vunpack.c.l.b16 %v86
    %v135 = vunpack.c.l.b16 %v87
    %v136 = vunpack.c.l.b16 %v88
    %v137 = vunpack.c.l.b16 %v89
    %v138 = vunpack.c.l.b16 %v90
    %v139 = vunpack.c.l.b16 %v91
    %v140 = vunpack.c.l.b16 %v92
    %v141 = vunpack.c.l.b16 %v93
    %v142 = vunpack.c.l.b16 %v94
    %v143 = vunpack.c.l.b16 %v95
    %v144 = vpack.c.b16 %v129, %v128
    %v145 = vpack.c.b16 %v131, %v130
    %v146 = vpack.c.b16 %v133, %v132
    %v147 = vpack.c.b16 %v135, %v134
    %v148 = vpack.c.b16 %v137, %v136
    %v149 = vpack.c.b16 %v139, %v138
    %v150 = vpack.c.b16 %v141, %v140
    %v151 = vpack.c.b16 %v143, %v142
    %v176 = vunpack.c.l.b16 %v96
    %v177 = vunpack.c.l.b16 %v97
    %v178 = vunpack.c.l.b16 %v98
    %v179 = vunpack.c.l.b16 %v99
    %v180 = vunpack.c.l.b16 %v100
    %v181 = vunpack.c.l.b16 %v101
    %v182 = vunpack.c.l.b16 %v102
    %v183 = vunpack.c.l.b16 %v103
    %v184 = vunpack.c.l.b16 %v104
    %v185 = vunpack.c.l.b16 %v105
    %v186 = vunpack.c.l.b16 %v106
    %v187 = vunpack.c.l.b16 %v107
    %v188 = vunpack.c.l.b16 %v108
    %v189 = vunpack.c.l.b16 %v109
    %v190 = vunpack.c.l.b16 %v110
    %v191 = vunpack.c.l.b16 %v111
    %v192 = vpack.c.b16 %v177, %v176
    %v193 = vpack.c.b16 %v179, %v178
    %v194 = vpack.c.b16 %v181, %v180
    %v195 = vpack.c.b16 %v183, %v182
    %v196 = vpack.c.b16 %v185, %v184
    %v197 = vpack.c.b16 %v187, %v186
    %v198 = vpack.c.b16 %v189, %v188
    %v199 = vpack.c.b16 %v191, %v190
    %208 = vmatprep.subr.bf16.mxu0 0
    %209 = vmatpush1.bf16.msra.mxu0 %v192
    %210 = vmatprep.subr.bf16.mxu0 0
    %211 = vmatpush1.bf16.msra.mxu0 %v193
    %212 = vmatprep.subr.bf16.mxu0 0
    %213 = vmatpush1.bf16.msra.mxu0 %v194
    %214 = vmatprep.subr.bf16.mxu0 0
    %215 = vmatpush1.bf16.msra.mxu0 %v195
    %216 = vmatprep.subr.bf16.mxu0 0
    %217 = vmatpush1.bf16.msra.mxu0 %v196
    %218 = vmatprep.subr.bf16.mxu0 0
    %219 = vmatpush1.bf16.msra.mxu0 %v197
    %220 = vmatprep.subr.bf16.mxu0 0
    %221 = vmatpush1.bf16.msra.mxu0 %v198
    %222 = vmatprep.subr.bf16.mxu0 0
    %223 = vmatpush1.bf16.msra.mxu0 %v199
    %224 = vmatprep.subr.bf16.mxu0 0
    %225 = vmatpush1.bf16.msra.mxu0 0
    %226 = vmatprep.subr.bf16.mxu0 0
    %227 = vmatpush1.bf16.msra.mxu0 0
    %228 = vmatprep.subr.bf16.mxu0 0
    %229 = vmatpush1.bf16.msra.mxu0 0
    %230 = vmatprep.subr.bf16.mxu0 0
    %231 = vmatpush1.bf16.msra.mxu0 0
    %232 = vmatprep.subr.bf16.mxu0 0
    %233 = vmatpush1.bf16.msra.mxu0 0
    %234 = vmatprep.subr.bf16.mxu0 0
    %235 = vmatpush1.bf16.msra.mxu0 0
    %236 = vmatprep.subr.bf16.mxu0 0
    %237 = vmatpush1.bf16.msra.mxu0 0
    %238 = vmatprep.subr.bf16.mxu0 0
    %239 = vmatpush1.bf16.msra.mxu0 0
    %240 = vmatprep.mubr.bf16.mxu0 0
    %241 = vmatmul.mubr.bf16.gmra.mrb[0].mxu0 %v144
    %v242 = vpop.f32.mrb[0].mxu0
    %v243 = vadd.f32 0.0, %v242
    %v244 = vpop.f32.mrb[0].mxu0
    %v245 = vpop.f32.mrb[0].mxu0
    %v246 = vadd.f32 0.0, %v245
    %v247 = vpop.f32.mrb[0].mxu0
    %248 = vmatprep.mubr.bf16.mxu0 0
    %249 = vmatmul.mubr.bf16.gmra.mrb[0].mxu0 %v145
    %v250 = vpop.f32.mrb[0].mxu0
    %v251 = vadd.f32 0.0, %v250
    %v252 = vpop.f32.mrb[0].mxu0
    %v253 = vpop.f32.mrb[0].mxu0
    %v254 = vadd.f32 0.0, %v253
    %v255 = vpop.f32.mrb[0].mxu0
    %256 = vmatprep.mubr.bf16.mxu0 0
    %257 = vmatmul.mubr.bf16.gmra.mrb[0].mxu0 %v146
    %v258 = vpop.f32.mrb[0].mxu0
    %v259 = vadd.f32 0.0, %v258
    %v260 = vpop.f32.mrb[0].mxu0
    %v261 = vpop.f32.mrb[0].mxu0
    %v262 = vadd.f32 0.0, %v261
    %v263 = vpop.f32.mrb[0].mxu0
    %264 = vmatprep.mubr.bf16.mxu0 0
    %265 = vmatmul.mubr.bf16.gmra.mrb[0].mxu0 %v147
    %v266 = vpop.f32.mrb[0].mxu0
    %v267 = vadd.f32 0.0, %v266
    %v268 = vpop.f32.mrb[0].mxu0
    %v269 = vpop.f32.mrb[0].mxu0
    %v270 = vadd.f32 0.0, %v269
    %v271 = vpop.f32.mrb[0].mxu0
    %272 = vmatprep.mubr.bf16.mxu0 0
    %273 = vmatmul.mubr.bf16.gmra.mrb[0].mxu0 %v148
    %v274 = vpop.f32.mrb[0].mxu0
    %v275 = vadd.f32 0.0, %v274
    %v276 = vpop.f32.mrb[0].mxu0
    %v277 = vpop.f32.mrb[0].mxu0
    %v278 = vadd.f32 0.0, %v277
    %v279 = vpop.f32.mrb[0].mxu0
    %280 = vmatprep.mubr.bf16.mxu0 0
    %281 = vmatmul.mubr.bf16.gmra.mrb[0].mxu0 %v149
    %v282 = vpop.f32.mrb[0].mxu0
    %v283 = vadd.f32 0.0, %v282
    %v284 = vpop.f32.mrb[0].mxu0
    %v285 = vpop.f32.mrb[0].mxu0
    %v286 = vadd.f32 0.0, %v285
    %v287 = vpop.f32.mrb[0].mxu0
    %288 = vmatprep.mubr.bf16.mxu0 0
    %289 = vmatmul.mubr.bf16.gmra.mrb[0].mxu0 %v150
    %v290 = vpop.f32.mrb[0].mxu0
    %v291 = vadd.f32 0.0, %v290
    %v292 = vpop.f32.mrb[0].mxu0
    %v293 = vpop.f32.mrb[0].mxu0
    %v294 = vadd.f32 0.0, %v293
    %v295 = vpop.f32.mrb[0].mxu0
    %296 = vmatprep.mubr.bf16.mxu0 0
    %297 = vmatmul.mubr.bf16.gmra.mrb[0].mxu0 %v151
    %v298 = vpop.f32.mrb[0].mxu0
    %v299 = vadd.f32 0.0, %v298
    %v300 = vpop.f32.mrb[0].mxu0
    %v301 = vpop.f32.mrb[0].mxu0
    %v302 = vadd.f32 0.0, %v301
    %v303 = vpop.f32.mrb[0].mxu0
    %304 = vdwg.mxu0
    %v305 = vpack.c.bf16 %v246, %v243
    %v306 = vpack.c.bf16 %v254, %v251
    %v307 = vpack.c.bf16 %v262, %v259
    %v308 = vpack.c.bf16 %v270, %v267
    %v309 = vpack.c.bf16 %v278, %v275
    %v310 = vpack.c.bf16 %v286, %v283
    %v311 = vpack.c.bf16 %v294, %v291
    %v312 = vpack.c.bf16 %v302, %v299
    %v313 = vld [vmem:[#allocation7] sm:$0xf]
    %v314 = vld [vmem:[#allocation7 + $0x4] sm:$0xf]
    %v315 = vld [vmem:[#allocation7 + $0x8] sm:$0xf]
    %v316 = vld [vmem:[#allocation7 + $0xc] sm:$0xf]
    %v317 = vld [vmem:[#allocation7 + $0x10] sm:$0xf]
    %v318 = vld [vmem:[#allocation7 + $0x14] sm:$0xf]
    %v319 = vld [vmem:[#allocation7 + $0x18] sm:$0xf]
    %v320 = vld [vmem:[#allocation7 + $0x1c] sm:$0xf]
    %v321 = vld [vmem:[#allocation7 + $0x20] sm:$0xf]
    %v322 = vld [vmem:[#allocation7 + $0x24] sm:$0xf]
    %v323 = vld [vmem:[#allocation7 + $0x28] sm:$0xf]
    %v324 = vld [vmem:[#allocation7 + $0x2c] sm:$0xf]
    %v325 = vld [vmem:[#allocation7 + $0x30] sm:$0xf]
    %v326 = vld [vmem:[#allocation7 + $0x34] sm:$0xf]
    %v327 = vld [vmem:[#allocation7 + $0x38] sm:$0xf]
    %v328 = vld [vmem:[#allocation7 + $0x3c] sm:$0xf]
    %v329 = vld [vmem:[#allocation7 + $0x40] sm:$0xf]
    %v330 = vld [vmem:[#allocation7 + $0x44] sm:$0xf]
    %v331 = vld [vmem:[#allocation7 + $0x48] sm:$0xf]
    %v332 = vld [vmem:[#allocation7 + $0x4c] sm:$0xf]
    %v333 = vld [vmem:[#allocation7 + $0x50] sm:$0xf]
    %v334 = vld [vmem:[#allocation7 + $0x54] sm:$0xf]
    %v335 = vld [vmem:[#allocation7 + $0x58] sm:$0xf]
    %v336 = vld [vmem:[#allocation7 + $0x5c] sm:$0xf]
    %v337 = vld [vmem:[#allocation7 + $0x60] sm:$0xf]
    %v338 = vld [vmem:[#allocation7 + $0x64] sm:$0xf]
    %v339 = vld [vmem:[#allocation7 + $0x68] sm:$0xf]
    %v340 = vld [vmem:[#allocation7 + $0x6c] sm:$0xf]
    %v341 = vld [vmem:[#allocation7 + $0x70] sm:$0xf]
    %v342 = vld [vmem:[#allocation7 + $0x74] sm:$0xf]
    %v343 = vld [vmem:[#allocation7 + $0x78] sm:$0xf]
    %v344 = vld [vmem:[#allocation7 + $0x7c] sm:$0xf]
    %v345 = vld [vmem:[%s3] sm:$0x1]
    %v347 = vlaneseq
    %v348 = vshrl.u32 %v347, 7
    %v349 = vsub.s32 0, %v348
    %v350 = vrot.slane %v345, %v349
    %v384 = vunpack.c.l.b16 %v313
    %v385 = vunpack.c.l.b16 %v314
    %v386 = vunpack.c.l.b16 %v315
    %v387 = vunpack.c.l.b16 %v316
    %v388 = vunpack.c.l.b16 %v317
    %v389 = vunpack.c.l.b16 %v318
    %v390 = vunpack.c.l.b16 %v319
    %v391 = vunpack.c.l.b16 %v320
    %v392 = vunpack.c.l.b16 %v321
    %v393 = vunpack.c.l.b16 %v322
    %v394 = vunpack.c.l.b16 %v323
    %v395 = vunpack.c.l.b16 %v324
    %v396 = vunpack.c.l.b16 %v325
    %v397 = vunpack.c.l.b16 %v326
    %v398 = vunpack.c.l.b16 %v327
    %v399 = vunpack.c.l.b16 %v328
    %v400 = vunpack.c.l.b16 %v329
    %v401 = vunpack.c.l.b16 %v330
    %v402 = vunpack.c.l.b16 %v331
    %v403 = vunpack.c.l.b16 %v332
    %v404 = vunpack.c.l.b16 %v333
    %v405 = vunpack.c.l.b16 %v334
    %v406 = vunpack.c.l.b16 %v335
    %v407 = vunpack.c.l.b16 %v336
    %v408 = vunpack.c.l.b16 %v337
    %v409 = vunpack.c.l.b16 %v338
    %v410 = vunpack.c.l.b16 %v339
    %v411 = vunpack.c.l.b16 %v340
    %v412 = vunpack.c.l.b16 %v341
    %v413 = vunpack.c.l.b16 %v342
    %v414 = vunpack.c.l.b16 %v343
    %v415 = vunpack.c.l.b16 %v344
    %v416 = vpack.c.b16 %v385, %v384
    %v417 = vpack.c.b16 %v387, %v386
    %v418 = vpack.c.b16 %v389, %v388
    %v419 = vpack.c.b16 %v391, %v390
    %v420 = vpack.c.b16 %v393, %v392
    %v421 = vpack.c.b16 %v395, %v394
    %v422 = vpack.c.b16 %v397, %v396
    %v423 = vpack.c.b16 %v399, %v398
    %v424 = vpack.c.b16 %v401, %v400
    %v425 = vpack.c.b16 %v403, %v402
    %v426 = vpack.c.b16 %v405, %v404
    %v427 = vpack.c.b16 %v407, %v406
    %v428 = vpack.c.b16 %v409, %v408
    %v429 = vpack.c.b16 %v411, %v410
    %v430 = vpack.c.b16 %v413, %v412
    %v431 = vpack.c.b16 %v415, %v414
    %448 = vmatprep.subr.bf16.mxu0 0
    %449 = vmatpush1.bf16.msra.mxu0 %v416
    %450 = vmatprep.subr.bf16.mxu0 0
    %451 = vmatpush1.bf16.msra.mxu0 %v417
    %452 = vmatprep.subr.bf16.mxu0 0
    %453 = vmatpush1.bf16.msra.mxu0 %v418
    %454 = vmatprep.subr.bf16.mxu0 0
    %455 = vmatpush1.bf16.msra.mxu0 %v419
    %456 = vmatprep.subr.bf16.mxu0 0
    %457 = vmatpush1.bf16.msra.mxu0 %v420
    %458 = vmatprep.subr.bf16.mxu0 0
    %459 = vmatpush1.bf16.msra.mxu0 %v421
    %460 = vmatprep.subr.bf16.mxu0 0
    %461 = vmatpush1.bf16.msra.mxu0 %v422
    %462 = vmatprep.subr.bf16.mxu0 0
    %463 = vmatpush1.bf16.msra.mxu0 %v423
    %464 = vmatprep.subr.bf16.mxu0 0
    %465 = vmatpush1.bf16.msra.mxu0 %v424
    %466 = vmatprep.subr.bf16.mxu0 0
    %467 = vmatpush1.bf16.msra.mxu0 %v425
    %468 = vmatprep.subr.bf16.mxu0 0
    %469 = vmatpush1.bf16.msra.mxu0 %v426
    %470 = vmatprep.subr.bf16.mxu0 0
    %471 = vmatpush1.bf16.msra.mxu0 %v427
    %472 = vmatprep.subr.bf16.mxu0 0
    %473 = vmatpush1.bf16.msra.mxu0 %v428
    %474 = vmatprep.subr.bf16.mxu0 0
    %475 = vmatpush1.bf16.msra.mxu0 %v429
    %476 = vmatprep.subr.bf16.mxu0 0
    %477 = vmatpush1.bf16.msra.mxu0 %v430
    %478 = vmatprep.subr.bf16.mxu0 0
    %479 = vmatpush1.bf16.msra.mxu0 %v431
    %480 = vmatprep.mubr.bf16.mxu0 %v192
    %481 = vmatmul.mubr.bf16.gmra.mrb[0].mxu0 %v305
    %v482 = vpop.f32.mrb[0].mxu0
    %v483 = vadd.f32 %v350, %v482
    %v484 = vpop.f32.mrb[0].mxu0
    %v485 = vpop.f32.mrb[0].mxu0
    %v486 = vadd.f32 %v350, %v485
    %v487 = vpop.f32.mrb[0].mxu0
    %488 = vmatprep.mubr.bf16.mxu0 %v193
    %489 = vmatmul.mubr.bf16.gmra.mrb[0].mxu0 %v306
    %v490 = vpop.f32.mrb[0].mxu0
    %v491 = vadd.f32 %v350, %v490
    %v492 = vpop.f32.mrb[0].mxu0
    %v493 = vpop.f32.mrb[0].mxu0
    %v494 = vadd.f32 %v350, %v493
    %v495 = vpop.f32.mrb[0].mxu0
    %496 = vmatprep.mubr.bf16.mxu0 %v194
    %497 = vmatmul.mubr.bf16.gmra.mrb[0].mxu0 %v307
    %v498 = vpop.f32.mrb[0].mxu0
    %v499 = vadd.f32 %v350, %v498
    %v500 = vpop.f32.mrb[0].mxu0
    %v501 = vpop.f32.mrb[0].mxu0
    %v502 = vadd.f32 %v350, %v501
    %v503 = vpop.f32.mrb[0].mxu0
    %504 = vmatprep.mubr.bf16.mxu0 %v195
    %505 = vmatmul.mubr.bf16.gmra.mrb[0].mxu0 %v308
    %v506 = vpop.f32.mrb[0].mxu0
    %v507 = vadd.f32 %v350, %v506
    %v508 = vpop.f32.mrb[0].mxu0
    %v509 = vpop.f32.mrb[0].mxu0
    %v510 = vadd.f32 %v350, %v509
    %v511 = vpop.f32.mrb[0].mxu0
    %512 = vmatprep.mubr.bf16.mxu0 %v196
    %513 = vmatmul.mubr.bf16.gmra.mrb[0].mxu0 %v309
    %v514 = vpop.f32.mrb[0].mxu0
    %v515 = vadd.f32 %v350, %v514
    %v516 = vpop.f32.mrb[0].mxu0
    %v517 = vpop.f32.mrb[0].mxu0
    %v518 = vadd.f32 %v350, %v517
    %v519 = vpop.f32.mrb[0].mxu0
    %520 = vmatprep.mubr.bf16.mxu0 %v197
    %521 = vmatmul.mubr.bf16.gmra.mrb[0].mxu0 %v310
    %v522 = vpop.f32.mrb[0].mxu0
    %v523 = vadd.f32 %v350, %v522
    %v524 = vpop.f32.mrb[0].mxu0
    %v525 = vpop.f32.mrb[0].mxu0
    %v526 = vadd.f32 %v350, %v525
    %v527 = vpop.f32.mrb[0].mxu0
    %528 = vmatprep.mubr.bf16.mxu0 %v198
    %529 = vmatmul.mubr.bf16.gmra.mrb[0].mxu0 %v311
    %v530 = vpop.f32.mrb[0].mxu0
    %v531 = vadd.f32 %v350, %v530
    %v532 = vpop.f32.mrb[0].mxu0
    %v533 = vpop.f32.mrb[0].mxu0
    %v534 = vadd.f32 %v350, %v533
    %v535 = vpop.f32.mrb[0].mxu0
    %536 = vmatprep.mubr.bf16.mxu0 %v199
    %537 = vmatmul.mubr.bf16.gmra.mrb[0].mxu0 %v312
    %v538 = vpop.f32.mrb[0].mxu0
    %v539 = vadd.f32 %v350, %v538
    %v540 = vpop.f32.mrb[0].mxu0
    %v541 = vpop.f32.mrb[0].mxu0
    %v542 = vadd.f32 %v350, %v541
    %v543 = vpop.f32.mrb[0].mxu0
    %544 = vdwg.mxu0
    %v545 = vmax.f32 %v483, 0.0
    %v546 = vmax.f32 %v486, 0.0
    %v547 = vmax.f32 %v491, 0.0
    %v548 = vmax.f32 %v494, 0.0
    %v549 = vmax.f32 %v499, 0.0
    %v550 = vmax.f32 %v502, 0.0
    %v551 = vmax.f32 %v507, 0.0
    %v552 = vmax.f32 %v510, 0.0
    %v553 = vmax.f32 %v515, 0.0
    %v554 = vmax.f32 %v518, 0.0
    %v555 = vmax.f32 %v523, 0.0
    %v556 = vmax.f32 %v526, 0.0
    %v557 = vmax.f32 %v531, 0.0
    %v558 = vmax.f32 %v534, 0.0
    %v559 = vmax.f32 %v539, 0.0
    %v560 = vmax.f32 %v542, 0.0
    %v561 = vpack.c.bf16 %v546, %v545
    %v562 = vpack.c.bf16 %v548, %v547
    %v563 = vpack.c.bf16 %v550, %v549
    %v564 = vpack.c.bf16 %v552, %v551
    %v565 = vpack.c.bf16 %v554, %v553
    %v566 = vpack.c.bf16 %v556, %v555
    %v567 = vpack.c.bf16 %v558, %v557
    %v568 = vpack.c.bf16 %v560, %v559
    %569 = vmatprep.subr.bf16.mxu0 0
    %570 = vmatpush1.bf16.msra.mxu0 %v561
    %571 = vmatprep.subr.bf16.mxu0 0
    %572 = vmatpush1.bf16.msra.mxu0 %v562
    %573 = vmatprep.subr.bf16.mxu0 0
    %574 = vmatpush1.bf16.msra.mxu0 %v563
    %575 = vmatprep.subr.bf16.mxu0 0
    %576 = vmatpush1.bf16.msra.mxu0 %v564
    %577 = vmatprep.subr.bf16.mxu0 0
    %578 = vmatpush1.bf16.msra.mxu0 %v565
    %579 = vmatprep.subr.bf16.mxu0 0
    %580 = vmatpush1.bf16.msra.mxu0 %v566
    %581 = vmatprep.subr.bf16.mxu0 0
    %582 = vmatpush1.bf16.msra.mxu0 %v567
    %583 = vmatprep.subr.bf16.mxu0 0
    %584 = vmatpush1.bf16.msra.mxu0 %v568
    %585 = vmatprep.subr.bf16.mxu0 0
    %586 = vmatpush1.bf16.msra.mxu0 0
    %587 = vmatprep.subr.bf16.mxu0 0
    %588 = vmatpush1.bf16.msra.mxu0 0
    %589 = vmatprep.subr.bf16.mxu0 0
    %590 = vmatpush1.bf16.msra.mxu0 0
    %591 = vmatprep.subr.bf16.mxu0 0
    %592 = vmatpush1.bf16.msra.mxu0 0
    %593 = vmatprep.subr.bf16.mxu0 0
    %594 = vmatpush1.bf16.msra.mxu0 0
    %595 = vmatprep.subr.bf16.mxu0 0
    %596 = vmatpush1.bf16.msra.mxu0 0
    %597 = vmatprep.subr.bf16.mxu0 0
    %598 = vmatpush1.bf16.msra.mxu0 0
    %599 = vmatprep.subr.bf16.mxu0 0
    %600 = vmatpush1.bf16.msra.mxu0 0
    %601 = vmatprep.mubr.bf16.mxu0 0
    %602 = vmatmul.mubr.bf16.gmra.mrb[0].mxu0 %v144
    %v603 = vpop.f32.mrb[0].mxu0
    %v604 = vadd.f32 0.0, %v603
    %v605 = vpop.f32.mrb[0].mxu0
    %v606 = vpop.f32.mrb[0].mxu0
    %v607 = vadd.f32 0.0, %v606
    %v608 = vpop.f32.mrb[0].mxu0
    %609 = vmatprep.mubr.bf16.mxu0 0
    %610 = vmatmul.mubr.bf16.gmra.mrb[0].mxu0 %v145
    %v611 = vpop.f32.mrb[0].mxu0
    %v612 = vadd.f32 0.0, %v611
    %v613 = vpop.f32.mrb[0].mxu0
    %v614 = vpop.f32.mrb[0].mxu0
    %v615 = vadd.f32 0.0, %v614
    %v616 = vpop.f32.mrb[0].mxu0
    %617 = vmatprep.mubr.bf16.mxu0 0
    %618 = vmatmul.mubr.bf16.gmra.mrb[0].mxu0 %v146
    %v619 = vpop.f32.mrb[0].mxu0
    %v620 = vadd.f32 0.0, %v619
    %v621 = vpop.f32.mrb[0].mxu0
    %v622 = vpop.f32.mrb[0].mxu0
    %v623 = vadd.f32 0.0, %v622
    %v624 = vpop.f32.mrb[0].mxu0
    %625 = vmatprep.mubr.bf16.mxu0 0
    %626 = vmatmul.mubr.bf16.gmra.mrb[0].mxu0 %v147
    %v627 = vpop.f32.mrb[0].mxu0
    %v628 = vadd.f32 0.0, %v627
    %v629 = vpop.f32.mrb[0].mxu0
    %v630 = vpop.f32.mrb[0].mxu0
    %v631 = vadd.f32 0.0, %v630
    %v632 = vpop.f32.mrb[0].mxu0
    %633 = vmatprep.mubr.bf16.mxu0 0
    %634 = vmatmul.mubr.bf16.gmra.mrb[0].mxu0 %v148
    %v635 = vpop.f32.mrb[0].mxu0
    %v636 = vadd.f32 0.0, %v635
    %v637 = vpop.f32.mrb[0].mxu0
    %v638 = vpop.f32.mrb[0].mxu0
    %v639 = vadd.f32 0.0, %v638
    %v640 = vpop.f32.mrb[0].mxu0
    %641 = vmatprep.mubr.bf16.mxu0 0
    %642 = vmatmul.mubr.bf16.gmra.mrb[0].mxu0 %v149
    %v643 = vpop.f32.mrb[0].mxu0
    %v644 = vadd.f32 0.0, %v643
    %v645 = vpop.f32.mrb[0].mxu0
    %v646 = vpop.f32.mrb[0].mxu0
    %v647 = vadd.f32 0.0, %v646
    %v648 = vpop.f32.mrb[0].mxu0
    %649 = vmatprep.mubr.bf16.mxu0 0
    %650 = vmatmul.mubr.bf16.gmra.mrb[0].mxu0 %v150
    %v651 = vpop.f32.mrb[0].mxu0
    %v652 = vadd.f32 0.0, %v651
    %v653 = vpop.f32.mrb[0].mxu0
    %v654 = vpop.f32.mrb[0].mxu0
    %v655 = vadd.f32 0.0, %v654
    %v656 = vpop.f32.mrb[0].mxu0
    %657 = vmatprep.mubr.bf16.mxu0 0
    %658 = vmatmul.mubr.bf16.gmra.mrb[0].mxu0 %v151
    %v659 = vpop.f32.mrb[0].mxu0
    %v660 = vadd.f32 0.0, %v659
    %v661 = vpop.f32.mrb[0].mxu0
    %v662 = vpop.f32.mrb[0].mxu0
    %v663 = vadd.f32 0.0, %v662
    %v664 = vpop.f32.mrb[0].mxu0
    %665 = vdwg.mxu0
    %v666 = vpack.c.bf16 %v607, %v604
    %v667 = vpack.c.bf16 %v615, %v612
    %v668 = vpack.c.bf16 %v623, %v620
    %v669 = vpack.c.bf16 %v631, %v628
    %v670 = vpack.c.bf16 %v639, %v636
    %v671 = vpack.c.bf16 %v647, %v644
    %v672 = vpack.c.bf16 %v655, %v652
    %v673 = vpack.c.bf16 %v663, %v660
    %v674 = vld [vmem:[#allocation8] sm:$0xf]
    %v675 = vld [vmem:[#allocation8 + $0x4] sm:$0xf]
    %v676 = vld [vmem:[#allocation8 + $0x8] sm:$0xf]
    %v677 = vld [vmem:[#allocation8 + $0xc] sm:$0xf]
    %v678 = vld [vmem:[#allocation8 + $0x10] sm:$0xf]
    %v679 = vld [vmem:[#allocation8 + $0x14] sm:$0xf]
    %v680 = vld [vmem:[#allocation8 + $0x18] sm:$0xf]
    %v681 = vld [vmem:[#allocation8 + $0x1c] sm:$0xf]
    %v682 = vld [vmem:[#allocation8 + $0x20] sm:$0xf]
    %v683 = vld [vmem:[#allocation8 + $0x24] sm:$0xf]
    %v684 = vld [vmem:[#allocation8 + $0x28] sm:$0xf]
    %v685 = vld [vmem:[#allocation8 + $0x2c] sm:$0xf]
    %v686 = vld [vmem:[#allocation8 + $0x30] sm:$0xf]
    %v687 = vld [vmem:[#allocation8 + $0x34] sm:$0xf]
    %v688 = vld [vmem:[#allocation8 + $0x38] sm:$0xf]
    %v689 = vld [vmem:[#allocation8 + $0x3c] sm:$0xf]
    %v690 = vld [vmem:[#allocation8 + $0x40] sm:$0xf]
    %v691 = vld [vmem:[#allocation8 + $0x44] sm:$0xf]
    %v692 = vld [vmem:[#allocation8 + $0x48] sm:$0xf]
    %v693 = vld [vmem:[#allocation8 + $0x4c] sm:$0xf]
    %v694 = vld [vmem:[#allocation8 + $0x50] sm:$0xf]
    %v695 = vld [vmem:[#allocation8 + $0x54] sm:$0xf]
    %v696 = vld [vmem:[#allocation8 + $0x58] sm:$0xf]
    %v697 = vld [vmem:[#allocation8 + $0x5c] sm:$0xf]
    %v698 = vld [vmem:[#allocation8 + $0x60] sm:$0xf]
    %v699 = vld [vmem:[#allocation8 + $0x64] sm:$0xf]
    %v700 = vld [vmem:[#allocation8 + $0x68] sm:$0xf]
    %v701 = vld [vmem:[#allocation8 + $0x6c] sm:$0xf]
    %v702 = vld [vmem:[#allocation8 + $0x70] sm:$0xf]
    %v703 = vld [vmem:[#allocation8 + $0x74] sm:$0xf]
    %v704 = vld [vmem:[#allocation8 + $0x78] sm:$0xf]
    %v705 = vld [vmem:[#allocation8 + $0x7c] sm:$0xf]
    %v706 = vld [vmem:[%s5] sm:$0x1]
    %v708 = vlaneseq
    %v709 = vshrl.u32 %v708, 7
    %v710 = vsub.s32 0, %v709
    %v711 = vrot.slane %v706, %v710
    %v745 = vunpack.c.l.b16 %v674
    %v746 = vunpack.c.l.b16 %v675
    %v747 = vunpack.c.l.b16 %v676
    %v748 = vunpack.c.l.b16 %v677
    %v749 = vunpack.c.l.b16 %v678
    %v750 = vunpack.c.l.b16 %v679
    %v751 = vunpack.c.l.b16 %v680
    %v752 = vunpack.c.l.b16 %v681
    %v753 = vunpack.c.l.b16 %v682
    %v754 = vunpack.c.l.b16 %v683
    %v755 = vunpack.c.l.b16 %v684
    %v756 = vunpack.c.l.b16 %v685
    %v757 = vunpack.c.l.b16 %v686
    %v758 = vunpack.c.l.b16 %v687
    %v759 = vunpack.c.l.b16 %v688
    %v760 = vunpack.c.l.b16 %v689
    %v761 = vunpack.c.l.b16 %v690
    %v762 = vunpack.c.l.b16 %v691
    %v763 = vunpack.c.l.b16 %v692
    %v764 = vunpack.c.l.b16 %v693
    %v765 = vunpack.c.l.b16 %v694
    %v766 = vunpack.c.l.b16 %v695
    %v767 = vunpack.c.l.b16 %v696
    %v768 = vunpack.c.l.b16 %v697
    %v769 = vunpack.c.l.b16 %v698
    %v770 = vunpack.c.l.b16 %v699
    %v771 = vunpack.c.l.b16 %v700
    %v772 = vunpack.c.l.b16 %v701
    %v773 = vunpack.c.l.b16 %v702
    %v774 = vunpack.c.l.b16 %v703
    %v775 = vunpack.c.l.b16 %v704
    %v776 = vunpack.c.l.b16 %v705
    %v777 = vpack.c.b16 %v746, %v745
    %v778 = vpack.c.b16 %v748, %v747
    %v779 = vpack.c.b16 %v750, %v749
    %v780 = vpack.c.b16 %v752, %v751
    %v781 = vpack.c.b16 %v754, %v753
    %v782 = vpack.c.b16 %v756, %v755
    %v783 = vpack.c.b16 %v758, %v757
    %v784 = vpack.c.b16 %v760, %v759
    %v785 = vpack.c.b16 %v762, %v761
    %v786 = vpack.c.b16 %v764, %v763
    %v787 = vpack.c.b16 %v766, %v765
    %v788 = vpack.c.b16 %v768, %v767
    %v789 = vpack.c.b16 %v770, %v769
    %v790 = vpack.c.b16 %v772, %v771
    %v791 = vpack.c.b16 %v774, %v773
    %v792 = vpack.c.b16 %v776, %v775
    %809 = vmatprep.subr.bf16.mxu0 0
    %810 = vmatpush1.bf16.msra.mxu0 %v777
    %811 = vmatprep.subr.bf16.mxu0 0
    %812 = vmatpush1.bf16.msra.mxu0 %v778
    %813 = vmatprep.subr.bf16.mxu0 0
    %814 = vmatpush1.bf16.msra.mxu0 %v779
    %815 = vmatprep.subr.bf16.mxu0 0
    %816 = vmatpush1.bf16.msra.mxu0 %v780
    %817 = vmatprep.subr.bf16.mxu0 0
    %818 = vmatpush1.bf16.msra.mxu0 %v781
    %819 = vmatprep.subr.bf16.mxu0 0
    %820 = vmatpush1.bf16.msra.mxu0 %v782
    %821 = vmatprep.subr.bf16.mxu0 0
    %822 = vmatpush1.bf16.msra.mxu0 %v783
    %823 = vmatprep.subr.bf16.mxu0 0
    %824 = vmatpush1.bf16.msra.mxu0 %v784
    %825 = vmatprep.subr.bf16.mxu0 0
    %826 = vmatpush1.bf16.msra.mxu0 %v785
    %827 = vmatprep.subr.bf16.mxu0 0
    %828 = vmatpush1.bf16.msra.mxu0 %v786
    %829 = vmatprep.subr.bf16.mxu0 0
    %830 = vmatpush1.bf16.msra.mxu0 %v787
    %831 = vmatprep.subr.bf16.mxu0 0
    %832 = vmatpush1.bf16.msra.mxu0 %v788
    %833 = vmatprep.subr.bf16.mxu0 0
    %834 = vmatpush1.bf16.msra.mxu0 %v789
    %835 = vmatprep.subr.bf16.mxu0 0
    %836 = vmatpush1.bf16.msra.mxu0 %v790
    %837 = vmatprep.subr.bf16.mxu0 0
    %838 = vmatpush1.bf16.msra.mxu0 %v791
    %839 = vmatprep.subr.bf16.mxu0 0
    %840 = vmatpush1.bf16.msra.mxu0 %v792
    %841 = vmatprep.mubr.bf16.mxu0 %v561
    %842 = vmatmul.mubr.bf16.gmra.mrb[0].mxu0 %v666
    %v843 = vpop.f32.mrb[0].mxu0
    %v844 = vadd.f32 %v711, %v843
    %v845 = vpop.f32.mrb[0].mxu0
    %v846 = vpop.f32.mrb[0].mxu0
    %v847 = vadd.f32 %v711, %v846
    %v848 = vpop.f32.mrb[0].mxu0
    %849 = vmatprep.mubr.bf16.mxu0 %v562
    %850 = vmatmul.mubr.bf16.gmra.mrb[0].mxu0 %v667
    %v851 = vpop.f32.mrb[0].mxu0
    %v852 = vadd.f32 %v711, %v851
    %v853 = vpop.f32.mrb[0].mxu0
    %v854 = vpop.f32.mrb[0].mxu0
    %v855 = vadd.f32 %v711, %v854
    %v856 = vpop.f32.mrb[0].mxu0
    %857 = vmatprep.mubr.bf16.mxu0 %v563
    %858 = vmatmul.mubr.bf16.gmra.mrb[0].mxu0 %v668
    %v859 = vpop.f32.mrb[0].mxu0
    %v860 = vadd.f32 %v711, %v859
    %v861 = vpop.f32.mrb[0].mxu0
    %v862 = vpop.f32.mrb[0].mxu0
    %v863 = vadd.f32 %v711, %v862
    %v864 = vpop.f32.mrb[0].mxu0
    %865 = vmatprep.mubr.bf16.mxu0 %v564
    %866 = vmatmul.mubr.bf16.gmra.mrb[0].mxu0 %v669
    %v867 = vpop.f32.mrb[0].mxu0
    %v868 = vadd.f32 %v711, %v867
    %v869 = vpop.f32.mrb[0].mxu0
    %v870 = vpop.f32.mrb[0].mxu0
    %v871 = vadd.f32 %v711, %v870
    %v872 = vpop.f32.mrb[0].mxu0
    %873 = vmatprep.mubr.bf16.mxu0 %v565
    %874 = vmatmul.mubr.bf16.gmra.mrb[0].mxu0 %v670
    %v875 = vpop.f32.mrb[0].mxu0
    %v876 = vadd.f32 %v711, %v875
    %v877 = vpop.f32.mrb[0].mxu0
    %v878 = vpop.f32.mrb[0].mxu0
    %v879 = vadd.f32 %v711, %v878
    %v880 = vpop.f32.mrb[0].mxu0
    %881 = vmatprep.mubr.bf16.mxu0 %v566
    %882 = vmatmul.mubr.bf16.gmra.mrb[0].mxu0 %v671
    %v883 = vpop.f32.mrb[0].mxu0
    %v884 = vadd.f32 %v711, %v883
    %v885 = vpop.f32.mrb[0].mxu0
    %v886 = vpop.f32.mrb[0].mxu0
    %v887 = vadd.f32 %v711, %v886
    %v888 = vpop.f32.mrb[0].mxu0
    %889 = vmatprep.mubr.bf16.mxu0 %v567
    %890 = vmatmul.mubr.bf16.gmra.mrb[0].mxu0 %v672
    %v891 = vpop.f32.mrb[0].mxu0
    %v892 = vadd.f32 %v711, %v891
    %v893 = vpop.f32.mrb[0].mxu0
    %v894 = vpop.f32.mrb[0].mxu0
    %v895 = vadd.f32 %v711, %v894
    %v896 = vpop.f32.mrb[0].mxu0
    %897 = vmatprep.mubr.bf16.mxu0 %v568
    %898 = vmatmul.mubr.bf16.gmra.mrb[0].mxu0 %v673
    %v899 = vpop.f32.mrb[0].mxu0
    %v900 = vadd.f32 %v711, %v899
    %v901 = vpop.f32.mrb[0].mxu0
    %v902 = vpop.f32.mrb[0].mxu0
    %v903 = vadd.f32 %v711, %v902
    %v904 = vpop.f32.mrb[0].mxu0
    %905 = vdwg.mxu0
    %v906 = vlaneseq
    %v907 = vand.u32 %v906, 127
    %vm908 = vcmp.lt.s32.totalorder %v907, 8
    %v909 = vsel %vm908, %v844, -1e+30
    %v910 = vsel %vm908, %v847, -1e+30
    %v911 = vsel %vm908, %v852, -1e+30
    %v912 = vsel %vm908, %v855, -1e+30
    %v913 = vsel %vm908, %v860, -1e+30
    %v914 = vsel %vm908, %v863, -1e+30
    %v915 = vsel %vm908, %v868, -1e+30
    %v916 = vsel %vm908, %v871, -1e+30
    %v917 = vsel %vm908, %v876, -1e+30
    %v918 = vsel %vm908, %v879, -1e+30
    %v919 = vsel %vm908, %v884, -1e+30
    %v920 = vsel %vm908, %v887, -1e+30
    %v921 = vsel %vm908, %v892, -1e+30
    %v922 = vsel %vm908, %v895, -1e+30
    %v923 = vsel %vm908, %v900, -1e+30
    %v924 = vsel %vm908, %v903, -1e+30
    %925 = vmax.xlane.f32.xlu0 %v909
    %v926 = vpop.xlane.xlu0 %925
    %927 = vmax.xlane.f32.xlu0 %v910
    %v928 = vpop.xlane.xlu0 %927
    %929 = vmax.xlane.f32.xlu0 %v911
    %v930 = vpop.xlane.xlu0 %929
    %931 = vmax.xlane.f32.xlu0 %v912
    %v932 = vpop.xlane.xlu0 %931
    %933 = vmax.xlane.f32.xlu0 %v913
    %v934 = vpop.xlane.xlu0 %933
    %935 = vmax.xlane.f32.xlu0 %v914
    %v936 = vpop.xlane.xlu0 %935
    %937 = vmax.xlane.f32.xlu0 %v915
    %v938 = vpop.xlane.xlu0 %937
    %939 = vmax.xlane.f32.xlu0 %v916
    %v940 = vpop.xlane.xlu0 %939
    %941 = vmax.xlane.f32.xlu0 %v917
    %v942 = vpop.xlane.xlu0 %941
    %943 = vmax.xlane.f32.xlu0 %v918
    %v944 = vpop.xlane.xlu0 %943
    %945 = vmax.xlane.f32.xlu0 %v919
    %v946 = vpop.xlane.xlu0 %945
    %947 = vmax.xlane.f32.xlu0 %v920
    %v948 = vpop.xlane.xlu0 %947
    %949 = vmax.xlane.f32.xlu0 %v921
    %v950 = vpop.xlane.xlu0 %949
    %951 = vmax.xlane.f32.xlu0 %v922
    %v952 = vpop.xlane.xlu0 %951
    %953 = vmax.xlane.f32.xlu0 %v923
    %v954 = vpop.xlane.xlu0 %953
    %955 = vmax.xlane.f32.xlu0 %v924
    %v956 = vpop.xlane.xlu0 %955
    %v957 = vsub.f32 %v909, %v926
    %v958 = vsub.f32 %v910, %v928
    %v959 = vsub.f32 %v911, %v930
    %v960 = vsub.f32 %v912, %v932
    %v961 = vsub.f32 %v913, %v934
    %v962 = vsub.f32 %v914, %v936
    %v963 = vsub.f32 %v915, %v938
    %v964 = vsub.f32 %v916, %v940
    %v965 = vsub.f32 %v917, %v942
    %v966 = vsub.f32 %v918, %v944
    %v967 = vsub.f32 %v919, %v946
    %v968 = vsub.f32 %v920, %v948
    %v969 = vsub.f32 %v921, %v950
    %v970 = vsub.f32 %v922, %v952
    %v971 = vsub.f32 %v923, %v954
    %v972 = vsub.f32 %v924, %v956
    %v973 = vmul.f32 %v957, 1.442695
    %v974 = vpow.pop %v973
    %v975 = vmul.f32 %v958, 1.442695
    %v976 = vpow.pop %v975
    %v977 = vmul.f32 %v959, 1.442695
    %v978 = vpow.pop %v977
    %v979 = vmul.f32 %v960, 1.442695
    %v980 = vpow.pop %v979
    %v981 = vmul.f32 %v961, 1.442695
    %v982 = vpow.pop %v981
    %v983 = vmul.f32 %v962, 1.442695
    %v984 = vpow.pop %v983
    %v985 = vmul.f32 %v963, 1.442695
    %v986 = vpow.pop %v985
    %v987 = vmul.f32 %v964, 1.442695
    %v988 = vpow.pop %v987
    %v989 = vmul.f32 %v965, 1.442695
    %v990 = vpow.pop %v989
    %v991 = vmul.f32 %v966, 1.442695
    %v992 = vpow.pop %v991
    %v993 = vmul.f32 %v967, 1.442695
    %v994 = vpow.pop %v993
    %v995 = vmul.f32 %v968, 1.442695
    %v996 = vpow.pop %v995
    %v997 = vmul.f32 %v969, 1.442695
    %v998 = vpow.pop %v997
    %v999 = vmul.f32 %v970, 1.442695
    %v1000 = vpow.pop %v999
    %v1001 = vmul.f32 %v971, 1.442695
    %v1002 = vpow.pop %v1001
    %v1003 = vmul.f32 %v972, 1.442695
    %v1004 = vpow.pop %v1003
    %1005 = vadd.xlane.f32.xlu0 %v974
    %v1006 = vpop.xlane.xlu0 %1005
    %1007 = vadd.xlane.f32.xlu0 %v976
    %v1008 = vpop.xlane.xlu0 %1007
    %1009 = vadd.xlane.f32.xlu0 %v978
    %v1010 = vpop.xlane.xlu0 %1009
    %1011 = vadd.xlane.f32.xlu0 %v980
    %v1012 = vpop.xlane.xlu0 %1011
    %1013 = vadd.xlane.f32.xlu0 %v982
    %v1014 = vpop.xlane.xlu0 %1013
    %1015 = vadd.xlane.f32.xlu0 %v984
    %v1016 = vpop.xlane.xlu0 %1015
    %1017 = vadd.xlane.f32.xlu0 %v986
    %v1018 = vpop.xlane.xlu0 %1017
    %1019 = vadd.xlane.f32.xlu0 %v988
    %v1020 = vpop.xlane.xlu0 %1019
    %1021 = vadd.xlane.f32.xlu0 %v990
    %v1022 = vpop.xlane.xlu0 %1021
    %1023 = vadd.xlane.f32.xlu0 %v992
    %v1024 = vpop.xlane.xlu0 %1023
    %1025 = vadd.xlane.f32.xlu0 %v994
    %v1026 = vpop.xlane.xlu0 %1025
    %1027 = vadd.xlane.f32.xlu0 %v996
    %v1028 = vpop.xlane.xlu0 %1027
    %1029 = vadd.xlane.f32.xlu0 %v998
    %v1030 = vpop.xlane.xlu0 %1029
    %1031 = vadd.xlane.f32.xlu0 %v1000
    %v1032 = vpop.xlane.xlu0 %1031
    %1033 = vadd.xlane.f32.xlu0 %v1002
    %v1034 = vpop.xlane.xlu0 %1033
    %1035 = vadd.xlane.f32.xlu0 %v1004
    %v1036 = vpop.xlane.xlu0 %1035
    %v1037 = vlog2.pop %v1006
    %v1038 = vmul.f32 %v1037, 0.6931472
    %v1039 = vlog2.pop %v1008
    %v1040 = vmul.f32 %v1039, 0.6931472
    %v1041 = vlog2.pop %v1010
    %v1042 = vmul.f32 %v1041, 0.6931472
    %v1043 = vlog2.pop %v1012
    %v1044 = vmul.f32 %v1043, 0.6931472
    %v1045 = vlog2.pop %v1014
    %v1046 = vmul.f32 %v1045, 0.6931472
    %v1047 = vlog2.pop %v1016
    %v1048 = vmul.f32 %v1047, 0.6931472
    %v1049 = vlog2.pop %v1018
    %v1050 = vmul.f32 %v1049, 0.6931472
    %v1051 = vlog2.pop %v1020
    %v1052 = vmul.f32 %v1051, 0.6931472
    %v1053 = vlog2.pop %v1022
    %v1054 = vmul.f32 %v1053, 0.6931472
    %v1055 = vlog2.pop %v1024
    %v1056 = vmul.f32 %v1055, 0.6931472
    %v1057 = vlog2.pop %v1026
    %v1058 = vmul.f32 %v1057, 0.6931472
    %v1059 = vlog2.pop %v1028
    %v1060 = vmul.f32 %v1059, 0.6931472
    %v1061 = vlog2.pop %v1030
    %v1062 = vmul.f32 %v1061, 0.6931472
    %v1063 = vlog2.pop %v1032
    %v1064 = vmul.f32 %v1063, 0.6931472
    %v1065 = vlog2.pop %v1034
    %v1066 = vmul.f32 %v1065, 0.6931472
    %v1067 = vlog2.pop %v1036
    %v1068 = vmul.f32 %v1067, 0.6931472
    %v1069 = vsub.f32 %v957, %v1038
    %v1070 = vsub.f32 %v958, %v1040
    %v1071 = vsub.f32 %v959, %v1042
    %v1072 = vsub.f32 %v960, %v1044
    %v1073 = vsub.f32 %v961, %v1046
    %v1074 = vsub.f32 %v962, %v1048
    %v1075 = vsub.f32 %v963, %v1050
    %v1076 = vsub.f32 %v964, %v1052
    %v1077 = vsub.f32 %v965, %v1054
    %v1078 = vsub.f32 %v966, %v1056
    %v1079 = vsub.f32 %v967, %v1058
    %v1080 = vsub.f32 %v968, %v1060
    %v1081 = vsub.f32 %v969, %v1062
    %v1082 = vsub.f32 %v970, %v1064
    %v1083 = vsub.f32 %v971, %v1066
    %v1084 = vsub.f32 %v972, %v1068
    %1085 = vst [vmem:[#allocation10] sm:$0xff] %v1069
    %1086 = vst [vmem:[#allocation10 + $0x8] sm:$0xff] %v1070
    %1087 = vst [vmem:[#allocation10 + $0x10] sm:$0xff] %v1071
    %1088 = vst [vmem:[#allocation10 + $0x18] sm:$0xff] %v1072
    %1089 = vst [vmem:[#allocation10 + $0x20] sm:$0xff] %v1073
    %1090 = vst [vmem:[#allocation10 + $0x28] sm:$0xff] %v1074
    %1091 = vst [vmem:[#allocation10 + $0x30] sm:$0xff] %v1075
    %1092 = vst [vmem:[#allocation10 + $0x38] sm:$0xff] %v1076
    %1093 = vst [vmem:[#allocation10 + $0x40] sm:$0xff] %v1077
    %1094 = vst [vmem:[#allocation10 + $0x48] sm:$0xff] %v1078
    %1095 = vst [vmem:[#allocation10 + $0x50] sm:$0xff] %v1079
    %1096 = vst [vmem:[#allocation10 + $0x58] sm:$0xff] %v1080
    %1097 = vst [vmem:[#allocation10 + $0x60] sm:$0xff] %v1081
    %1098 = vst [vmem:[#allocation10 + $0x68] sm:$0xff] %v1082
    %1099 = vst [vmem:[#allocation10 + $0x70] sm:$0xff] %v1083
    %1100 = vst [vmem:[#allocation10 + $0x78] sm:$0xff] %v1084
    // Predicated region
    $region42: #{tpu_custom_call.1} parent=1 // pred_check
      _
    $region43: #{tpu_custom_call.1} parent=1 // pred_check_branch
      %1102 = sbr.rel (0) target = $region45
    $region44: #{tpu_custom_call.1} parent=1 // pred_region
      %s1104 = ssub.s32 2048, 2048
      %1105 = vsyncadd [#allocation4], %s1104
      %s1106 = sshll.u32 [#allocation10], 4
      %s1107 = int_to_ptr.vmem [resolvable:$true] %s1106
      %1112 = dma.vmem_to_hbm [thread:$0]  %s1107, 2048, %s6, [#allocation4], 128, 128, 8
    $region45: #{tpu_custom_call.1} parent=1 // pred_fallthru
      _
    // Predicated region
    $region46: #{tpu_custom_call.1} parent=1 // pred_check
      _
    $region47: #{tpu_custom_call.1} parent=1 // pred_check_branch
      %1114 = sbr.rel (0) target = $region49
    $region48: #{tpu_custom_call.1} parent=1 // pred_region
      %1115 = dma.done [#allocation4], 2048
    $region49: #{tpu_custom_call.1} parent=1 // pred_fallthru
      _
    %1116 = vsyncpa [#allocation3], 1
    %1117 = vsyncpa [#allocation6], 1
    %1118 = vsyncpa [#allocation9], 1
    %1119 = vsyncpa [#allocation4], 1

</llo_original>
